<compile_context>
chip_gen: v6e
topology: v6e:2x2x1
jax: 0.10.0
libtpu: 0.0.40
codegen_flags: <defaults>
</compile_context>

<pallas_src>
import functools

import jax
import jax.numpy as jnp
from jax.experimental import pallas as pl
from jax.experimental.pallas import tpu as pltpu

_MiB = 1024 * 1024
_MAX_LANE_TILE = 64 * 128      # caps the unrolled 128-lane chunk loop


def _sigmoid(x):
    return 1.0 / (1.0 + jnp.exp(-x))


# ---------------------------------------------------------------------------
# Kernel 1: global spatial max pool (AdaptiveMaxPool2d(1)).
# ---------------------------------------------------------------------------
def _pool_kernel(x_ref, pooled_ref, acc_ref, *, hw, hw_tile, need_mask):
    t = pl.program_id(1)                       # spatial (reduction) axis

    @pl.when(t == 0)
    def _():
        acc_ref[...] = jnp.full(acc_ref.shape, -jnp.inf, acc_ref.dtype)

    rows_blk = x_ref.shape[0]
    nchunks = hw_tile // 128

    if need_mask:
        # Global lane index of each element of a 128-wide chunk; lanes >= hw
        # are padding and must not win the max.
        lane0 = (jax.lax.broadcasted_iota(jnp.int32, (rows_blk, 128), 1)
                 + t * hw_tile)
        minus_inf = jnp.full((rows_blk, 128), -jnp.inf, acc_ref.dtype)

    # Fold hw_tile lanes down to 128 with lane-aligned VPU maxes only; the
    # cross-lane collapse is deferred to the per-row-block epilogue below.
    m = acc_ref[...]
    for c in range(nchunks):
        v = x_ref[:, c * 128:(c + 1) * 128]
        if need_mask:
            v = jnp.where(lane0 + c * 128 < hw, v, minus_inf)
        m = jnp.maximum(m, v)
    acc_ref[...] = m

    @pl.when(t == pl.num_programs(1) - 1)
    def _():
        # One cross-lane (XLU) reduce + one narrow store per row block.
        pooled_ref[...] = jnp.max(acc_ref[...], axis=1,
                                  keepdims=True).astype(pooled_ref.dtype)


# ---------------------------------------------------------------------------
# Kernel 2: FC1 -> sigmoid -> FC2 -> BatchNorm (batch stats) -> sigmoid.
# Tiny: single un-gridded invocation, everything resident in VMEM.
# ---------------------------------------------------------------------------
def _head_kernel(p_ref, w1_ref, b1_ref, w2_ref, b2_ref, gamma_ref, beta_ref,
                 out_ref, *, eps):
    p = p_ref[...].astype(jnp.float32)                                # (B, C_in)
    # FC1 (1x1 conv + bias) + sigmoid.
    h = jnp.dot(p, w1_ref[...], preferred_element_type=jnp.float32) + b1_ref[...]
    h = _sigmoid(h)                                                   # (B, C_mid)
    # FC2 (1x1 conv + bias).
    o = jnp.dot(h, w2_ref[...], preferred_element_type=jnp.float32) + b2_ref[...]
    # BatchNorm2d, training mode: stats over the batch dim (spatial is 1x1),
    # biased variance, two-pass (centered squares) to avoid cancellation.
    mean = jnp.mean(o, axis=0, keepdims=True)                         # (1, C_out)
    cent = o - mean
    var = jnp.mean(cent * cent, axis=0, keepdims=True)
    o = cent * jax.lax.rsqrt(var + eps) * gamma_ref[...] + beta_ref[...]
    out_ref[...] = _sigmoid(o)                                        # (B, C_out)


# ---------------------------------------------------------------------------
# Tiling / VMEM budgeting (generation-aware).
# ---------------------------------------------------------------------------
def _vmem_info():
    """(physical VMEM bytes, per-input-buffer streaming budget in bytes)."""
    phys = 128 * _MiB
    try:
        phys = int(pltpu.get_tpu_info().vmem_capacity_bytes)
    except Exception:
        pass
    # Leave room for double-buffered x blocks + lane-wide accumulator:
    # ~10 MiB/buffer on 64 MiB parts (v7x-class), ~14 MiB on 128 MiB parts.
    budget = 10 * _MiB if phys <= 64 * _MiB else 14 * _MiB
    return phys, budget


def _choose_tiles(rows, hw, itemsize, budget):
    """Lane-dense spatial tile (multiple of 128) and sublane row tile."""
    hw_pad = ((hw + 127) // 128) * 128
    lane_cap = max(128, min(_MAX_LANE_TILE,
                            (budget // (8 * itemsize)) // 128 * 128))
    hw_tile = min(hw_pad, lane_cap)          # full spatial width if it fits
    row_cap = max(8, (budget // (hw_tile * itemsize)) // 8 * 8)
    row_tile = rows if rows <= row_cap else row_cap
    return row_tile, hw_tile


def init_params(key, inplanes, outplanes, ratio):
    """Matmul-friendly layouts of the PyTorch parameters:
      FC1.weight (C_mid, C_in, 1, 1) -> w1 (C_in, C_mid);  FC1.bias -> b1 (1, C_mid)
      FC2.weight (C_out, C_mid, 1, 1)-> w2 (C_mid, C_out); FC2.bias -> b2 (1, C_out)
      BN.weight/bias -> gamma/beta (1, C_out)
    """
    c_mid = inplanes // ratio
    ks = jax.random.split(key, 6)
    s = 0.5
    return dict(
        w1=jax.random.normal(ks[0], (inplanes, c_mid), jnp.float32) * s,
        b1=jax.random.normal(ks[1], (1, c_mid), jnp.float32) * s,
        w2=jax.random.normal(ks[2], (c_mid, outplanes), jnp.float32) * s,
        b2=jax.random.normal(ks[3], (1, outplanes), jnp.float32) * s,
        gamma=1.0 + 0.1 * jax.random.normal(ks[4], (1, outplanes), jnp.float32),
        beta=0.1 * jax.random.normal(ks[5], (1, outplanes), jnp.float32),
    )


def cam_forward(x, params, eps=1e-5):
    """x: (B, C_in, H, W) NCHW.  Returns channel_weight (B, C_out, 1, 1)."""
    B, C_in, H, W = x.shape
    if not jnp.issubdtype(x.dtype, jnp.floating):
        x = x.astype(jnp.float32)
    HW = H * W
    rows = B * C_in
    C_out = params["w2"].shape[1]

    # Pure reshape of NCHW (no transpose, no dtype cast): stream natively.
    x2 = x.reshape(rows, HW)
    itemsize = x2.dtype.itemsize

    phys_vmem, budget = _vmem_info()
    row_tile, hw_tile = _choose_tiles(rows, HW, itemsize, budget)
    grid = (pl.cdiv(rows, row_tile), pl.cdiv(HW, hw_tile))
    need_mask = (HW % hw_tile) != 0

    x_block_bytes = row_tile * hw_tile * itemsize
    acc_bytes = row_tile * 128 * itemsize
    out_bytes = row_tile * 128 * 4            # (row_tile, 1) block, lane-padded
    vmem_limit = 2 * x_block_bytes + acc_bytes + 2 * out_bytes + 4 * _MiB
    vmem_limit = min(int(phys_vmem * 0.9), max(32 * _MiB, vmem_limit))

    pooled = pl.pallas_call(
        functools.partial(_pool_kernel, hw=HW, hw_tile=hw_tile,
                          need_mask=need_mask),
        out_shape=jax.ShapeDtypeStruct((rows, 1), jnp.float32),
        grid_spec=pltpu.PrefetchScalarGridSpec(
            num_scalar_prefetch=0,
            grid=grid,
            in_specs=[pl.BlockSpec((row_tile, hw_tile), lambda r, t: (r, t))],
            out_specs=pl.BlockSpec((row_tile, 1), lambda r, t: (r, 0)),
            scratch_shapes=[pltpu.VMEM((row_tile, 128), x2.dtype)],
        ),
        # hw axis is a reduction (scratch + resident output) -> 'arbitrary';
        # row blocks are independent -> 'parallel' (megacore-shardable).
        compiler_params=pltpu.CompilerParams(
            dimension_semantics=("parallel", "arbitrary"),
            vmem_limit_bytes=vmem_limit,
        ),
    )(x2)

    # (B*C_in, 1) -> (B, C_in): tiny wrapper-side regrouping of the pooled
    # column; replaces the previous Lsel / tiled-W1 trick (no O(B^2*C_in)
    # constants, no per-call jnp.tile of W1).
    pooled_bc = pooled.reshape(B, C_in)

    # Note: in-kernel dots use Mosaic's default f32 matmul path; at CAM's tiny
    # channel counts this matches the f32 reference well within tolerance.
    out = pl.pallas_call(
        functools.partial(_head_kernel, eps=eps),
        out_shape=jax.ShapeDtypeStruct((B, C_out), jnp.float32),
    )(pooled_bc, params["w1"], params["b1"], params["w2"], params["b2"],
      params["gamma"], params["beta"])

    # (B, C_out) -> (B, C_out, 1, 1): matches the PyTorch module's output.
    return out.reshape(B, C_out, 1, 1)


def reference_forward(x, params, eps=1e-5):
    """Pure-JAX reference of the PyTorch CAM forward (training-mode BN)."""
    B, C_in, H, W = x.shape
    hp = jax.lax.Precision.HIGHEST
    pooled = jnp.max(x.reshape(B, C_in, H * W).astype(jnp.float32), axis=-1)
    h = jnp.dot(pooled, params["w1"], precision=hp) + params["b1"][0]
    h = 1.0 / (1.0 + jnp.exp(-h))
    o = jnp.dot(h, params["w2"], precision=hp) + params["b2"][0]
    mean = jnp.mean(o, axis=0, keepdims=True)
    cent = o - mean
    var = jnp.mean(cent * cent, axis=0, keepdims=True)
    o = cent * jax.lax.rsqrt(var + eps) * params["gamma"] + params["beta"]
    o = 1.0 / (1.0 + jnp.exp(-o))
    return o.reshape(B, -1, 1, 1)


if __name__ == "__main__":
    # TODO(synk): BatchNorm2d running_mean/running_var buffer updates are a
    # training-time side effect only; they do not affect the returned tensor.
    B, inplanes, outplanes, ratio, H, W = 4, 4, 32, 2, 16, 16

    key = jax.random.PRNGKey(0)
    kx, kp = jax.random.split(key)
    x = jax.random.normal(kx, (B, inplanes, H, W), jnp.float32)
    params = init_params(kp, inplanes, outplanes, ratio)

    out = cam_forward(x, params)
    out = jax.block_until_ready(out)

    ref = reference_forward(x, params)
    assert out.shape == (B, outplanes, 1, 1)
    assert bool(jnp.all(jnp.isfinite(out)))
    assert bool(jnp.allclose(out, ref, rtol=1e-3, atol=1e-3)), \
        float(jnp.max(jnp.abs(out - ref)))

    print("KERNEL_OK")
</pallas_src>

<mosaic_0001>
module attributes {stable_mosaic.version = 11 : i64} {
  func.func @_pool_kernel(%arg0: i32, %arg1: i32, %arg2: memref<16x256xf32, #tpu.memory_space<vmem>>, %arg3: memref<16x1xf32, #tpu.memory_space<vmem>>, %arg4: memref<16x128xf32, #tpu.memory_space<vmem>>) attributes {dimension_semantics = [#tpu.dimension_semantics<parallel>, #tpu.dimension_semantics<arbitrary>], iteration_bounds = array<i64: 1, 1>, scalar_prefetch = 0 : i64, scratch_operands = 1 : i64, tpu.core_type = #tpu.core_type<tc>, window_params = [{transform_indices = @transform_0, window_bounds = array<i64: 16, 256>}, {transform_indices = @transform_1, window_bounds = array<i64: 16, 1>}]} {
    %c0_i32 = arith.constant 0 : i32
    %0 = arith.cmpi eq, %arg1, %c0_i32 : i32
    %1 = arith.extui %0 : i1 to i32
    %c0_i32_0 = arith.constant 0 : i32
    %2 = arith.cmpi ne, %1, %c0_i32_0 : i32
    scf.if %2 {
      %cst = arith.constant 0xFF800000 : f32
      %12 = vector.broadcast %cst : f32 to vector<16x128xf32>
      %c0_9 = arith.constant 0 : index
      %c0_10 = arith.constant 0 : index
      %13 = vector.load %arg4[%c0_9, %c0_10] : memref<16x128xf32, #tpu.memory_space<vmem>>, vector<16x128xf32>
      tpu.vector_store %arg4[%c0_9, %c0_10], %12 {strides = array<i32>} : memref<16x128xf32, #tpu.memory_space<vmem>>, vector<16x128xf32>,
    } else {
    }
    %c0 = arith.constant 0 : index
    %c0_1 = arith.constant 0 : index
    %3 = vector.load %arg4[%c0, %c0_1] : memref<16x128xf32, #tpu.memory_space<vmem>>, vector<16x128xf32>
    %c0_2 = arith.constant 0 : index
    %c0_3 = arith.constant 0 : index
    %4 = vector.load %arg2[%c0_2, %c0_3] : memref<16x256xf32, #tpu.memory_space<vmem>>, vector<16x128xf32>
    %5 = arith.maximumf %3, %4 : vector<16x128xf32>
    %c0_4 = arith.constant 0 : index
    %c128 = arith.constant 128 : index
    %6 = vector.load %arg2[%c0_4, %c128] : memref<16x256xf32, #tpu.memory_space<vmem>>, vector<16x128xf32>
    %7 = arith.maximumf %5, %6 : vector<16x128xf32>
    %c0_5 = arith.constant 0 : index
    %c0_6 = arith.constant 0 : index
    %8 = vector.load %arg4[%c0_5, %c0_6] : memref<16x128xf32, #tpu.memory_space<vmem>>, vector<16x128xf32>
    tpu.vector_store %arg4[%c0_5, %c0_6], %7 {strides = array<i32>} : memref<16x128xf32, #tpu.memory_space<vmem>>, vector<16x128xf32>,
    %c0_i32_7 = arith.constant 0 : i32
    %9 = arith.cmpi eq, %arg1, %c0_i32_7 : i32
    %10 = arith.extui %9 : i1 to i32
    %c0_i32_8 = arith.constant 0 : i32
    %11 = arith.cmpi ne, %10, %c0_i32_8 : i32
    scf.if %11 {
      %c0_9 = arith.constant 0 : index
      %c0_10 = arith.constant 0 : index
      %12 = vector.load %arg4[%c0_9, %c0_10] : memref<16x128xf32, #tpu.memory_space<vmem>>, vector<16x128xf32>
      %cst = arith.constant dense<0xFF800000> : vector<16xf32>
      %13 = vector.multi_reduction <maximumf>, %12, %cst [1] : vector<16x128xf32> to vector<16xf32>
      %14 = vector.shape_cast %13 : vector<16xf32> to vector<16x1xf32>
      %c0_11 = arith.constant 0 : index
      %c0_12 = arith.constant 0 : index
      %15 = vector.load %arg3[%c0_11, %c0_12] : memref<16x1xf32, #tpu.memory_space<vmem>>, vector<16x1xf32>
      tpu.vector_store %arg3[%c0_11, %c0_12], %14 {strides = array<i32>} : memref<16x1xf32, #tpu.memory_space<vmem>>, vector<16x1xf32>,
    } else {
    }
    return
  }
  func.func @transform_0(%arg0: i32, %arg1: i32) -> (i32, i32) {
    %c0_i32 = arith.constant 0 : i32
    return %arg0, %arg1 : i32, i32
  }
  func.func @transform_1(%arg0: i32, %arg1: i32) -> (i32, i32) {
    %c0_i32 = arith.constant 0 : i32
    %c0_i32_0 = arith.constant 0 : i32
    return %arg0, %c0_i32 : i32, i32
  }
}

</mosaic_0001>

<llo_original>
// kernel: tpu_custom_call.1
$region0: #{tpu_custom_call.1}
  #allocation0 [shape = 'u32[]', space=smem, size = 0x4, offset = 0x4, fixed_abs, tag = 'smem constant byte address 0x4 - core index']
  #allocation1 [shape = 'u32[144,128]{1,0:T(1,128)}', space=vmem, size = 0x12000, scoped, tag = 'internal scratch']
  #allocation2 [shape = 'f32[16,128]{1,0:T(8,128)}', space=vmem, size = 0x2000, scoped, tag = 'scratch operand']
  %s0 = inlined_call_operand.hbm [shape: f32[16,256], index: 0, kind: input, shape index: {}]
  %s1 = inlined_call_operand.vmem [shape: f32[16,1], index: 1, kind: output, shape index: {}]
  %s2 = sld [smem:[#allocation0]]
  $region26: #{tpu_custom_call.1} parent=0
    _
  %s4 = ssub.s32 1, %s2
  %s5 = scalar_select 0, %s4, %s2
  $region1: #{tpu_custom_call.1} parent=0
    #allocation3 [shape = 'u8[16384]{0}', space=vmem, size = 0x4000, scoped, tag = 'input window, operand 0, single buffered']
    #allocation4 [shape = 's32[1]{0}', space=sflag, size = 0x4, scoped, tag = 'scoped memory for tpu_custom_call.1']
    %6 = vsyncpa [#allocation4], 0
    // Predicated region
    $region2: #{tpu_custom_call.1} parent=1 // pred_check
      _
    $region3: #{tpu_custom_call.1} parent=1 // pred_check_branch
      %8 = sbr.rel (0) target = $region5
    $region4: #{tpu_custom_call.1} parent=1 // pred_region
      %s10 = ssub.s32 512, 512
      %11 = vsyncadd [#allocation4], %s10
      %s12 = sshll.u32 [#allocation3], 4
      %s13 = int_to_ptr.vmem [resolvable:$true] %s12
      %18 = dma.hbm_to_vmem [thread:$0]  %s0, 512, %s13, [#allocation4], 256, 256, 16
    $region5: #{tpu_custom_call.1} parent=1 // pred_fallthru
      _
    // Predicated region
    $region6: #{tpu_custom_call.1} parent=1 // pred_check
      _
    $region7: #{tpu_custom_call.1} parent=1 // pred_check_branch
      %20 = sbr.rel (0) target = $region9
    $region8: #{tpu_custom_call.1} parent=1 // pred_region
      %21 = dma.done [#allocation4], 512
    $region9: #{tpu_custom_call.1} parent=1 // pred_fallthru
      _
    %p22 = scmp.eq.s32.totalorder 0, 0
    // Predicated region
    $region10: #{tpu_custom_call.1} parent=1 // pred_check
      %p23 = pneg %p22
    $region11: #{tpu_custom_call.1} parent=1 // pred_check_branch
      %25 = sbr.rel (%p23) target = $region13
    $region12: #{tpu_custom_call.1} parent=1 // pred_region
      %26 = vst [vmem:[#allocation2] sm:$0xff] -inf
      %27 = vst [vmem:[#allocation2 + $0x8] sm:$0xff] -inf
    $region13: #{tpu_custom_call.1} parent=1 // pred_fallthru
      _
    %v28 = vld [vmem:[#allocation2] sm:$0xff]
    %v29 = vld [vmem:[#allocation2 + $0x8] sm:$0xff]
    %v30 = vld [vmem:[#allocation3] sm:$0xff]
    %v31 = vld [vmem:[#allocation3 + $0x10] sm:$0xff]
    %v32 = vmax.f32 %v28, %v30
    %v33 = vmax.f32 %v29, %v31
    %v34 = vld [vmem:[#allocation3 + $0x8] sm:$0xff]
    %v35 = vld [vmem:[#allocation3 + $0x18] sm:$0xff]
    %v36 = vmax.f32 %v32, %v34
    %v37 = vmax.f32 %v33, %v35
    %38 = vst [vmem:[#allocation2] sm:$0xff] %v36
    %39 = vst [vmem:[#allocation2 + $0x8] sm:$0xff] %v37
    // Predicated region
    $region14: #{tpu_custom_call.1} parent=1 // pred_check
      %p40 = pneg %p22
    $region15: #{tpu_custom_call.1} parent=1 // pred_check_branch
      %42 = sbr.rel (%p40) target = $region17
    $region16: #{tpu_custom_call.1} parent=1 // pred_region
      %v43 = vld [vmem:[#allocation2] sm:$0xff]
      %v44 = vld [vmem:[#allocation2 + $0x8] sm:$0xff]
      %45 = vmax.xlane.f32.xlu0 %v43
      %v46 = vpop.xlane.xlu0 %45
      %47 = vmax.xlane.f32.xlu0 %v44
      %v48 = vpop.xlane.xlu0 %47
      %vm49 = vcmask 7168
      %50 = vst.msk [vmem:[%s1] sm:$0xff] %vm49, %v46
      %51 = vst.msk [vmem:[%s1 + $0x8] sm:$0xff] %vm49, %v48
    $region17: #{tpu_custom_call.1} parent=1 // pred_fallthru
      _
    // Predicated region
    $region18: #{tpu_custom_call.1} parent=1 // pred_check
      _
    $region19: #{tpu_custom_call.1} parent=1 // pred_check_branch
      %53 = sbr.rel (0) target = $region21
    $region20: #{tpu_custom_call.1} parent=1 // pred_region
      _
    $region21: #{tpu_custom_call.1} parent=1 // pred_fallthru
      _
    // Predicated region
    $region22: #{tpu_custom_call.1} parent=1 // pred_check
      _
    $region23: #{tpu_custom_call.1} parent=1 // pred_check_branch
      %55 = sbr.rel (0) target = $region25
    $region24: #{tpu_custom_call.1} parent=1 // pred_region
      _
    $region25: #{tpu_custom_call.1} parent=1 // pred_fallthru
      _
    %56 = vsyncpa [#allocation4], 1

</llo_original>
